<compile_context>
chip_gen: v5e
topology: v5e:2x2
jax: 0.10.0
libtpu: 0.0.40
codegen_flags: <defaults>
</compile_context>

<pallas_src>
import jax
import jax.numpy as jnp
from jax import lax
from jax.experimental import pallas as pl
from jax.experimental.pallas import tpu as pltpu

TEMPERATURE = 0.5


def _round_up(x, m):
    return ((x + m - 1) // m) * m


def _make_kernel(inv_t, n_valid, tm, tn):
    def kernel(rows_ref, cols_ref, logdenom_ref, denom_acc):
        ri = pl.program_id(0)
        ci = pl.program_id(1)

        @pl.when(ci == 0)
        def _():
            denom_acc[...] = jnp.zeros_like(denom_acc)

        # Similarity tile: rows (tm, D) x cols (tn, D)^T, bf16 operands on the
        # MXU, f32 accumulation.  Rows are already unit-norm, so dots == cos.
        dots = lax.dot_general(
            rows_ref[...], cols_ref[...],
            dimension_numbers=(((1,), (1,)), ((), ())),
            preferred_element_type=jnp.float32)              # (tm, tn) f32

        e = jnp.exp(dots * inv_t)

        # Drop the self-similarity element and any zero-padded key columns.
        row_ids = ri * tm + lax.broadcasted_iota(jnp.int32, (tm, tn), 0)
        col_ids = ci * tn + lax.broadcasted_iota(jnp.int32, (tm, tn), 1)
        keep = (row_ids != col_ids) & (col_ids < n_valid)
        e = jnp.where(keep, e, 0.0)

        # Fold to 128 lanes with plain VPU adds (co-issue with MXU/EUP work);
        # the full cross-lane reduce happens once per row block below.
        part = e[:, 0:128]
        for j in range(1, tn // 128):
            part = part + e[:, j * 128:(j + 1) * 128]
        denom_acc[...] += part

        @pl.when(ci == pl.num_programs(1) - 1)
        def _():
            denom = jnp.sum(denom_acc[...], axis=1, keepdims=True)  # (tm, 1)
            logdenom_ref[...] = jnp.log(denom)

    return kernel


def _choose_tiles(n):
    """Lane-dense, MXU-friendly tiles. Returns (tm, tn, n_pad)."""
    tn = 256                          # column tile: lane-dense, MXU-width multiple
    n_pad = _round_up(n, tn)
    # Prefer >= 2 row blocks so the v7x second TensorCore has work on the
    # "parallel" row axis; otherwise take the larger row tile for reuse.
    tm = 256 if n_pad >= 512 else 128
    return tm, tn, n_pad


def _l2norm(x, eps=1e-12):
    nrm = jnp.sqrt(jnp.sum(x * x, axis=1, keepdims=True))
    return x / jnp.maximum(nrm, eps)


def infonce_loss(polyline_embs, c_embs, temperature=TEMPERATURE):
    """polyline_embs, c_embs: (B, D) arrays. Returns the scalar InfoNCE loss."""
    b, d = polyline_embs.shape
    assert c_embs.shape == (b, d)
    n = 2 * b
    inv_t = 1.0 / float(temperature)

    # --- one-time O(N*D) prep in XLA: normalize, positives, pad, bf16 cast ---
    p_norm = _l2norm(polyline_embs.astype(jnp.float32))
    c_norm = _l2norm(c_embs.astype(jnp.float32))
    positives = jnp.sum(p_norm * c_norm, axis=1)             # (B,) f32

    reps = jnp.concatenate([p_norm, c_norm], axis=0)         # (N, D) unit rows

    d_pad = _round_up(d, 128)
    tm, tn, n_pad = _choose_tiles(n)
    reps = jnp.pad(reps, ((0, n_pad - n), (0, d_pad - d)))   # zero rows/cols inert
    reps_bf16 = reps.astype(jnp.bfloat16)

    n_row_blocks = n_pad // tm
    n_col_blocks = n_pad // tn

    # VMEM budget: double-buffered bf16 input tiles + output + scratch + temps.
    est = (2 * (tm + tn) * d_pad * 2          # row + col tiles, double-buffered
           + 2 * tm * 4                       # (tm, 1) f32 output
           + tm * 128 * 4                     # (tm, 128) f32 accumulator
           + 4 * tm * tn * 4)                 # logits / exp / mask temporaries
    vmem_limit = int(min(max(2 * est, 32 * 1024 * 1024), 64 * 1024 * 1024))

    kernel = _make_kernel(inv_t, n, tm, tn)

    logdenom = pl.pallas_call(
        kernel,
        out_shape=jax.ShapeDtypeStruct((n_pad, 1), jnp.float32),
        grid_spec=pltpu.PrefetchScalarGridSpec(
            num_scalar_prefetch=0,
            grid=(n_row_blocks, n_col_blocks),
            in_specs=[
                pl.BlockSpec((tm, d_pad), lambda ri, ci: (ri, 0)),  # query rows
                pl.BlockSpec((tn, d_pad), lambda ri, ci: (ci, 0)),  # key columns
            ],
            out_specs=pl.BlockSpec((tm, 1), lambda ri, ci: (ri, 0)),
            scratch_shapes=[pltpu.VMEM((tm, 128), jnp.float32)],
        ),
        compiler_params=pltpu.CompilerParams(
            dimension_semantics=("parallel", "arbitrary"),
            vmem_limit_bytes=vmem_limit),
    )(reps_bf16, reps_bf16)

    # loss_i = log(denominator_i) - positives_i / T; positives repeat as [p, p].
    log_denom_valid = logdenom[:n, 0]
    loss_sum = jnp.sum(log_denom_valid) - 2.0 * inv_t * jnp.sum(positives)
    return loss_sum / jnp.float32(n)


def _reference(polyline_embs, c_embs, temperature=TEMPERATURE):
    # Pure-JAX mirror of the PyTorch module, for a sanity check.
    b = polyline_embs.shape[0]

    def l2norm(x):
        return x / jnp.maximum(
            jnp.linalg.norm(x, axis=1, keepdims=True), 1e-12)

    reps = jnp.concatenate([l2norm(polyline_embs), l2norm(c_embs)], axis=0)
    norms = jnp.linalg.norm(reps, axis=1, keepdims=True)
    sim = (reps @ reps.T) / jnp.maximum(norms * norms.T, 1e-8)
    n = 2 * b
    mask = 1.0 - jnp.eye(n)
    sim_ij = jnp.diagonal(sim, offset=b)
    sim_ji = jnp.diagonal(sim, offset=-b)
    positives = jnp.concatenate([sim_ij, sim_ji], axis=0)
    nominator = jnp.exp(positives / temperature)
    denominator = jnp.sum(mask * jnp.exp(sim / temperature), axis=1)
    return jnp.sum(-jnp.log(nominator / denominator)) / n


if __name__ == "__main__":
    key = jax.random.PRNGKey(0)
    k1, k2 = jax.random.split(key)
    B, D = 8, 32
    polyline_embs = jax.random.normal(k1, (B, D), dtype=jnp.float32)
    c_embs = jax.random.normal(k2, (B, D), dtype=jnp.float32)

    loss = infonce_loss(polyline_embs, c_embs)
    jax.block_until_ready(loss)

    ref = _reference(polyline_embs, c_embs)
    # bf16 MXU operands: expect ~1e-3 abs agreement; 2e-2 tolerance for margin.
    assert jnp.allclose(loss, ref, rtol=2e-2, atol=2e-2), (loss, ref)
    print("KERNEL_OK")
</pallas_src>

<mosaic_0001>
module attributes {stable_mosaic.version = 11 : i64} {
  func.func @kernel(%arg0: i32, %arg1: i32, %arg2: memref<128x128xbf16, #tpu.memory_space<vmem>>, %arg3: memref<256x128xbf16, #tpu.memory_space<vmem>>, %arg4: memref<128x1xf32, #tpu.memory_space<vmem>>, %arg5: memref<128x128xf32, #tpu.memory_space<vmem>>) attributes {dimension_semantics = [#tpu.dimension_semantics<parallel>, #tpu.dimension_semantics<arbitrary>], iteration_bounds = array<i64: 2, 1>, scalar_prefetch = 0 : i64, scratch_operands = 1 : i64, tpu.core_type = #tpu.core_type<tc>, window_params = [{transform_indices = @transform_0, window_bounds = array<i64: 128, 128>}, {transform_indices = @transform_1, window_bounds = array<i64: 256, 128>}, {transform_indices = @transform_2, window_bounds = array<i64: 128, 1>}]} {
    %c0_i32 = arith.constant 0 : i32
    %0 = arith.cmpi eq, %arg1, %c0_i32 : i32
    %1 = arith.extui %0 : i1 to i32
    %c0_i32_0 = arith.constant 0 : i32
    %2 = arith.cmpi ne, %1, %c0_i32_0 : i32
    scf.if %2 {
      %cst_12 = arith.constant 0.000000e+00 : f32
      %32 = vector.broadcast %cst_12 : f32 to vector<128x128xf32>
      %c0_13 = arith.constant 0 : index
      %c0_14 = arith.constant 0 : index
      %33 = vector.load %arg5[%c0_13, %c0_14] : memref<128x128xf32, #tpu.memory_space<vmem>>, vector<128x128xf32>
      tpu.vector_store %arg5[%c0_13, %c0_14], %32 {strides = array<i32>} : memref<128x128xf32, #tpu.memory_space<vmem>>, vector<128x128xf32>,
    } else {
    }
    %c0 = arith.constant 0 : index
    %c0_1 = arith.constant 0 : index
    %3 = vector.load %arg2[%c0, %c0_1] : memref<128x128xbf16, #tpu.memory_space<vmem>>, vector<128x128xbf16>
    %c0_2 = arith.constant 0 : index
    %c0_3 = arith.constant 0 : index
    %4 = vector.load %arg3[%c0_2, %c0_3] : memref<256x128xbf16, #tpu.memory_space<vmem>>, vector<256x128xbf16>
    %cst = arith.constant dense<0.000000e+00> : vector<128x256xf32>
    %5 = tpu.matmul %3, %4, %cst {dimension_numbers = #tpu.dot_dimension_numbers<[1], [1], [0], [0], [0, 0, 1, 0], [], []>} : vector<128x128xbf16>, vector<256x128xbf16>, vector<128x256xf32> -> vector<128x256xf32>
    %cst_4 = arith.constant 2.000000e+00 : f32
    %6 = vector.broadcast %cst_4 : f32 to vector<128x256xf32>
    %7 = arith.mulf %5, %6 : vector<128x256xf32>
    %8 = math.exp %7 : vector<128x256xf32>
    %c128_i32 = arith.constant 128 : i32
    %9 = arith.muli %arg0, %c128_i32 : i32
    %10 = tpu.iota {dimensions = array<i32: 0>} : vector<128x256xi32>
    %11 = vector.broadcast %9 : i32 to vector<128x256xi32>
    %12 = arith.addi %11, %10 : vector<128x256xi32>
    %c256_i32 = arith.constant 256 : i32
    %13 = arith.muli %arg1, %c256_i32 : i32
    %14 = tpu.iota {dimensions = array<i32: 1>} : vector<128x256xi32>
    %15 = vector.broadcast %13 : i32 to vector<128x256xi32>
    %16 = arith.addi %15, %14 : vector<128x256xi32>
    %17 = arith.cmpi ne, %12, %16 : vector<128x256xi32>
    %c16_i32 = arith.constant 16 : i32
    %18 = vector.broadcast %c16_i32 : i32 to vector<128x256xi32>
    %19 = arith.cmpi slt, %16, %18 : vector<128x256xi32>
    %20 = arith.andi %17, %19 : vector<128x256xi1>
    %cst_5 = arith.constant 0.000000e+00 : f32
    %21 = vector.broadcast %cst_5 : f32 to vector<128x256xf32>
    %22 = arith.select %20, %8, %21 : vector<128x256xi1>, vector<128x256xf32>
    %23 = vector.extract_strided_slice %22 {offsets = [0, 0], sizes = [128, 128], strides = [1, 1]} : vector<128x256xf32> to vector<128x128xf32>
    %24 = vector.extract_strided_slice %22 {offsets = [0, 128], sizes = [128, 128], strides = [1, 1]} : vector<128x256xf32> to vector<128x128xf32>
    %25 = arith.addf %23, %24 : vector<128x128xf32>
    %c0_6 = arith.constant 0 : index
    %c0_7 = arith.constant 0 : index
    %26 = vector.load %arg5[%c0_6, %c0_7] : memref<128x128xf32, #tpu.memory_space<vmem>>, vector<128x128xf32>
    %27 = arith.addf %26, %25 : vector<128x128xf32>
    %c0_8 = arith.constant 0 : index
    %c0_9 = arith.constant 0 : index
    %28 = vector.load %arg5[%c0_8, %c0_9] : memref<128x128xf32, #tpu.memory_space<vmem>>, vector<128x128xf32>
    tpu.vector_store %arg5[%c0_8, %c0_9], %27 {strides = array<i32>} : memref<128x128xf32, #tpu.memory_space<vmem>>, vector<128x128xf32>,
    %c0_i32_10 = arith.constant 0 : i32
    %29 = arith.cmpi eq, %arg1, %c0_i32_10 : i32
    %30 = arith.extui %29 : i1 to i32
    %c0_i32_11 = arith.constant 0 : i32
    %31 = arith.cmpi ne, %30, %c0_i32_11 : i32
    scf.if %31 {
      %c0_12 = arith.constant 0 : index
      %c0_13 = arith.constant 0 : index
      %32 = vector.load %arg5[%c0_12, %c0_13] : memref<128x128xf32, #tpu.memory_space<vmem>>, vector<128x128xf32>
      %cst_14 = arith.constant dense<0.000000e+00> : vector<128xf32>
      %33 = vector.multi_reduction <add>, %32, %cst_14 [1] : vector<128x128xf32> to vector<128xf32>
      %34 = vector.shape_cast %33 : vector<128xf32> to vector<128x1xf32>
      %35 = math.log %34 : vector<128x1xf32>
      %c0_15 = arith.constant 0 : index
      %c0_16 = arith.constant 0 : index
      %36 = vector.load %arg4[%c0_15, %c0_16] : memref<128x1xf32, #tpu.memory_space<vmem>>, vector<128x1xf32>
      tpu.vector_store %arg4[%c0_15, %c0_16], %35 {strides = array<i32>} : memref<128x1xf32, #tpu.memory_space<vmem>>, vector<128x1xf32>,
    } else {
    }
    return
  }
  func.func @transform_0(%arg0: i32, %arg1: i32) -> (i32, i32) {
    %c0_i32 = arith.constant 0 : i32
    %c0_i32_0 = arith.constant 0 : i32
    return %arg0, %c0_i32 : i32, i32
  }
  func.func @transform_1(%arg0: i32, %arg1: i32) -> (i32, i32) {
    %c0_i32 = arith.constant 0 : i32
    %c0_i32_0 = arith.constant 0 : i32
    return %arg1, %c0_i32 : i32, i32
  }
  func.func @transform_2(%arg0: i32, %arg1: i32) -> (i32, i32) {
    %c0_i32 = arith.constant 0 : i32
    %c0_i32_0 = arith.constant 0 : i32
    return %arg0, %c0_i32 : i32, i32
  }
}

</mosaic_0001>

<llo_original>
// kernel: tpu_custom_call.1
$region0: #{tpu_custom_call.1}
  #allocation0 [shape = 'u32[]', space=smem, size = 0x4, offset = 0x4, fixed_abs, tag = 'smem constant byte address 0x4 - core index']
  #allocation1 [shape = 'u32[72,128]{1,0:T(1,128)}', space=vmem, size = 0x9000, scoped, tag = 'internal scratch']
  #allocation2 [shape = 'f32[128,128]{1,0:T(8,128)}', space=vmem, size = 0x10000, scoped, tag = 'scratch operand']
  %s0 = inlined_call_operand.hbm [shape: bf16[256,128], index: 0, kind: input, shape index: {}]
  %s1 = inlined_call_operand.hbm [shape: bf16[256,128], index: 1, kind: input, shape index: {}]
  %s2 = inlined_call_operand.vmem [shape: f32[256,1], index: 2, kind: output, shape index: {}]
  %s3 = sld [smem:[#allocation0]]
  $region57: #{tpu_custom_call.1} parent=0
    _
  %s5 = ssub.s32 1, %s3
  %s6 = scalar_select 0, %s5, %s3
  $region1: #{tpu_custom_call.1} parent=0
    #allocation3 [shape = 'u8[65536]{0}', space=vmem, size = 0x10000, scoped, tag = 'input window, operand 0']
    #allocation4 [shape = 's32[2]{0}', space=sflag, size = 0x8, scoped, tag = 'scoped memory for tpu_custom_call.1']
    #allocation5 [shape = 'u8[65536]{0}', space=vmem, size = 0x10000, scoped, tag = 'input window, operand 1, single buffered']
    #allocation6 [shape = 's32[1]{0}', space=sflag, size = 0x4, scoped, tag = 'scoped memory for tpu_custom_call.1']
    %7 = vsyncpa [#allocation4], 0
    %s8 = scalar_lea.sflag [#allocation4], 1
    %9 = vsyncpa %s8, 0
    %10 = vsyncpa [#allocation6], 0
    loop: start=0, step=1, limit=4
    $region2: #{tpu_custom_call.1} parent=1 // loop_pre_header
      _
    $region3: #{tpu_custom_call.1} parent=1 // loop_header
      %s12 = sphi 0, %s16
      %p13 = scmp.ge.s32.totalorder %s12, 4
      %s19 = sphi 0, %s31
      %s20 = sphi 0, %s27
      %s21 = sphi 0, %s19
      %s22 = sphi 0, %s20
      %s23 = sphi 0, %s21
      %s24 = sphi 0, %s22
      %s34 = sphi 0, %s36
      %s37 = sphi 0, %s34
      %s38 = sphi 0, %s37
      %s54 = sphi 0, %s38
      %s60 = sphi 0, %s62
      %s63 = sphi 0, %s60
      %s64 = sphi 0, %s63
      %s80 = sphi 0, %s64
      %s86 = sphi 0, %s88
      %s89 = sphi 0, %s86
      %s90 = sphi 0, %s89
      %s106 = sphi 0, %s90
    $region4: #{tpu_custom_call.1} parent=1 // loop_header_branch
      %15 = sbr.rel (%p13) target = $region8
    $region5: #{tpu_custom_call.1} parent=1 // loop_body
      %s17 = ssub.s32 %s12, 1
      %s18 = ssub.s32 %s12, 2
      %s25 = sadd.s32 1, %s20
      %p26 = scmp.ge.s32.totalorder %s25, 1
      %s27 = scalar_select %p26, 0, %s25
      %s28 = sadd.s32 1, %s19
      %s29 = scalar_select %p26, %s28, %s19
      %p30 = scmp.ge.s32.totalorder %s29, 2
      %s31 = scalar_select %p30, 0, %s29
      %s32 = ssub.s32 %s19, %s31
      %p33 = scmp.eq.s32.totalorder %s32, 0
      %s35 = sadd.s32 %s34, 1
      %s36 = scalar_select %p33, %s34, %s35
      %p39 = pneg %p33
      %p40 = scmp.eq.s32.totalorder %s12, 1
      %p41 = por %p39, %p40
      %p42 = scmp.ne.s32.totalorder %s34, %s37
      %p43 = scmp.eq.s32.totalorder %s12, 0
      %p44 = por %p42, %p43
      %p45 = scmp.ne.s32.totalorder %s34, %s37
      %p46 = scmp.eq.s32.totalorder %s17, 1
      %p47 = por %p45, %p46
      %p48 = scmp.ne.s32.totalorder %s37, %s38
      %p49 = scmp.eq.s32.totalorder %s17, 0
      %p50 = por %p48, %p49
      %p51 = scmp.ne.s32.totalorder %s37, %s38
      %p52 = scmp.eq.s32.totalorder %s18, 1
      %p53 = por %p51, %p52
      %p55 = scmp.ne.s32.totalorder %s38, %s54
      %p56 = scmp.eq.s32.totalorder %s18, 0
      %p57 = por %p55, %p56
      %s58 = ssub.s32 %s20, %s27
      %p59 = scmp.eq.s32.totalorder %s58, 0
      %s61 = sadd.s32 %s60, 1
      %s62 = scalar_select %p59, %s60, %s61
      %p65 = pneg %p59
      %p66 = scmp.eq.s32.totalorder %s12, 1
      %p67 = por %p65, %p66
      %p68 = scmp.ne.s32.totalorder %s60, %s63
      %p69 = scmp.eq.s32.totalorder %s12, 0
      %p70 = por %p68, %p69
      %p71 = scmp.ne.s32.totalorder %s60, %s63
      %p72 = scmp.eq.s32.totalorder %s17, 1
      %p73 = por %p71, %p72
      %p74 = scmp.ne.s32.totalorder %s63, %s64
      %p75 = scmp.eq.s32.totalorder %s17, 0
      %p76 = por %p74, %p75
      %p77 = scmp.ne.s32.totalorder %s63, %s64
      %p78 = scmp.eq.s32.totalorder %s18, 1
      %p79 = por %p77, %p78
      %p81 = scmp.ne.s32.totalorder %s64, %s80
      %p82 = scmp.eq.s32.totalorder %s18, 0
      %p83 = por %p81, %p82
      %s84 = ssub.s32 %s19, %s31
      %p85 = scmp.eq.s32.totalorder %s84, 0
      %s87 = sadd.s32 %s86, 1
      %s88 = scalar_select %p85, %s86, %s87
      %p91 = pneg %p85
      %p92 = scmp.eq.s32.totalorder %s12, 1
      %p93 = por %p91, %p92
      %p94 = scmp.ne.s32.totalorder %s86, %s89
      %p95 = scmp.eq.s32.totalorder %s12, 0
      %p96 = por %p94, %p95
      %p97 = scmp.ne.s32.totalorder %s86, %s89
      %p98 = scmp.eq.s32.totalorder %s17, 1
      %p99 = por %p97, %p98
      %p100 = scmp.ne.s32.totalorder %s89, %s90
      %p101 = scmp.eq.s32.totalorder %s17, 0
      %p102 = por %p100, %p101
      %p103 = scmp.ne.s32.totalorder %s89, %s90
      %p104 = scmp.eq.s32.totalorder %s18, 1
      %p105 = por %p103, %p104
      %p107 = scmp.ne.s32.totalorder %s90, %s106
      %p108 = scmp.eq.s32.totalorder %s18, 0
      %p109 = por %p107, %p108
      %p110 = scmp.le.s32.totalorder 1, %s12
      %p111 = scmp.lt.s32.totalorder %s12, 3
      %p112 = pnand %p110, %p111
      %p113 = pneg %p112
      // Predicated region
      $region9: #{tpu_custom_call.1} parent=5 // pred_check
        _
      $region10: #{tpu_custom_call.1} parent=5 // pred_check_branch
        %115 = sbr.rel (%p112) target = $region12
      $region11: #{tpu_custom_call.1} parent=5 // pred_region
        %s116 = ssub.s32 %s12, 1
        // Predicated region
        $region13: #{tpu_custom_call.1} parent=11 // pred_check
          %p117 = pneg %p76
        $region14: #{tpu_custom_call.1} parent=11 // pred_check_branch
          %119 = sbr.rel (%p117) target = $region16
        $region15: #{tpu_custom_call.1} parent=11 // pred_region
          %s120 = smul.u32 32, %s22
          %122 = vsyncadd [#allocation6], 0
          %s123 = smul.addr %s120, 4
          %s124 = scalar_lea.hbm %s1, %s123
          %s125 = sshll.u32 %s124, 4
          %s126 = int_to_ptr.hbm [resolvable:$true] %s125
          %s127 = sshll.u32 [#allocation5], 4
          %s128 = int_to_ptr.vmem [resolvable:$true] %s127
          %133 = dma.hbm_to_vmem [thread:$0]  %s126, 2048, %s128, [#allocation6], 64, 64, 4
        $region16: #{tpu_custom_call.1} parent=11 // pred_fallthru
          _
      $region12: #{tpu_custom_call.1} parent=5 // pred_fallthru
        _
      %p134 = scmp.lt.s32.totalorder %s12, 2
      // Predicated region
      $region17: #{tpu_custom_call.1} parent=5 // pred_check
        %p135 = pneg %p134
      $region18: #{tpu_custom_call.1} parent=5 // pred_check_branch
        %137 = sbr.rel (%p135) target = $region20
      $region19: #{tpu_custom_call.1} parent=5 // pred_region
        // Predicated region
        $region21: #{tpu_custom_call.1} parent=19 // pred_check
          %p138 = pneg %p44
        $region22: #{tpu_custom_call.1} parent=19 // pred_check_branch
          %140 = sbr.rel (%p138) target = $region24
        $region23: #{tpu_custom_call.1} parent=19 // pred_region
          %s141 = sand.u32 %s34, 1
          %s142 = scalar_lea.sflag [#allocation4], %s141
          %s143 = sand.u32 %s34, 1
          %s144 = smul.addr %s143, 64
          %s145 = scalar_lea.vmem [#allocation3], %s144
          %s146 = smul.u32 16, %s19
          %148 = vsyncadd %s142, 0
          %s149 = smul.addr %s146, 4
          %s150 = scalar_lea.hbm %s0, %s149
          %s151 = sshll.u32 %s150, 4
          %s152 = int_to_ptr.hbm [resolvable:$true] %s151
          %s153 = sshll.u32 %s145, 4
          %s154 = int_to_ptr.vmem [resolvable:$true] %s153
          %159 = dma.hbm_to_vmem [thread:$0]  %s152, 1024, %s154, %s142, 64, 64, 4
        $region24: #{tpu_custom_call.1} parent=19 // pred_fallthru
          _
      $region20: #{tpu_custom_call.1} parent=5 // pred_fallthru
        _
      %p160 = scmp.le.s32.totalorder 1, %s12
      %p161 = scmp.lt.s32.totalorder %s12, 3
      %p162 = pnand %p160, %p161
      %p163 = pneg %p162
      // Predicated region
      $region25: #{tpu_custom_call.1} parent=5 // pred_check
        _
      $region26: #{tpu_custom_call.1} parent=5 // pred_check_branch
        %165 = sbr.rel (%p162) target = $region28
      $region27: #{tpu_custom_call.1} parent=5 // pred_region
        %s166 = ssub.s32 %s12, 1
        %s167 = sand.u32 %s37, 1
        %s168 = scalar_lea.sflag [#allocation4], %s167
        %s169 = sand.u32 %s37, 1
        %s170 = smul.addr %s169, 64
        %s171 = scalar_lea.vmem [#allocation3], %s170
        // Predicated region
        $region29: #{tpu_custom_call.1} parent=27 // pred_check
          %p172 = pneg %p50
        $region30: #{tpu_custom_call.1} parent=27 // pred_check_branch
          %174 = sbr.rel (%p172) target = $region32
        $region31: #{tpu_custom_call.1} parent=27 // pred_region
          %176 = dma.done %s168, 1024
        $region32: #{tpu_custom_call.1} parent=27 // pred_fallthru
          _
        // Predicated region
        $region33: #{tpu_custom_call.1} parent=27 // pred_check
          %p177 = pneg %p76
        $region34: #{tpu_custom_call.1} parent=27 // pred_check_branch
          %179 = sbr.rel (%p177) target = $region36
        $region35: #{tpu_custom_call.1} parent=27 // pred_region
          %181 = dma.done [#allocation6], 2048
        $region36: #{tpu_custom_call.1} parent=27 // pred_fallthru
          _
        %s182 = sand.u32 %s37, 1
        %s183 = scalar_lea.sflag [#allocation4], %s182
        %s184 = sand.u32 %s37, 1
        %s185 = smul.addr %s184, 64
        %s186 = scalar_lea.vmem [#allocation3], %s185
        %p187 = pneg %p50
        %p188 = pneg %p47
        %p189 = pneg %p76
        %p190 = pneg %p73
        %p191 = pneg %p102
        %p192 = pneg %p99
        %s193 = smul.u32 16, %s21
        %p194 = scmp.lt.s32.totalorder %s193, 31
        %s195 = scalar_select %p194, %s193, 31
        %s196 = smul.addr %s195, 8
        %s197 = scalar_lea.vmem %s2, %s196
        %s198 = smul.u32 16, %s21
        %s199 = smul.u32 32, %s22
        %s200 = smul.u32 16, %s21
        %p201 = scmp.lt.s32.totalorder %s200, 31
        %s202 = scalar_select %p201, %s200, 31
        %s203 = smul.addr %s202, 8
        %s204 = scalar_lea.vmem %s2, %s203
        %s205 = smul.u32 16, %s21
        %p206 = scmp.eq.s32.totalorder %s22, 0
        // Predicated region
        $region37: #{tpu_custom_call.1} parent=27 // pred_check
          %p207 = pneg %p206
        $region38: #{tpu_custom_call.1} parent=27 // pred_check_branch
          %209 = sbr.rel (%p207) target = $region40
        $region39: #{tpu_custom_call.1} parent=27 // pred_region
          %210 = vst [vmem:[#allocation2] sm:$0xff] 0.0
          %211 = vst [vmem:[#allocation2 + $0x8] sm:$0xff] 0.0
          %212 = vst [vmem:[#allocation2 + $0x10] sm:$0xff] 0.0
          %213 = vst [vmem:[#allocation2 + $0x18] sm:$0xff] 0.0
          %214 = vst [vmem:[#allocation2 + $0x20] sm:$0xff] 0.0
          %215 = vst [vmem:[#allocation2 + $0x28] sm:$0xff] 0.0
          %216 = vst [vmem:[#allocation2 + $0x30] sm:$0xff] 0.0
          %217 = vst [vmem:[#allocation2 + $0x38] sm:$0xff] 0.0
          %218 = vst [vmem:[#allocation2 + $0x40] sm:$0xff] 0.0
          %219 = vst [vmem:[#allocation2 + $0x48] sm:$0xff] 0.0
          %220 = vst [vmem:[#allocation2 + $0x50] sm:$0xff] 0.0
          %221 = vst [vmem:[#allocation2 + $0x58] sm:$0xff] 0.0
          %222 = vst [vmem:[#allocation2 + $0x60] sm:$0xff] 0.0
          %223 = vst [vmem:[#allocation2 + $0x68] sm:$0xff] 0.0
          %224 = vst [vmem:[#allocation2 + $0x70] sm:$0xff] 0.0
          %225 = vst [vmem:[#allocation2 + $0x78] sm:$0xff] 0.0
        $region40: #{tpu_custom_call.1} parent=27 // pred_fallthru
          _
        %v226 = vld [vmem:[%s171] sm:$0xf]
        %v227 = vld [vmem:[%s171 + $0x4] sm:$0xf]
        %v228 = vld [vmem:[%s171 + $0x8] sm:$0xf]
        %v229 = vld [vmem:[%s171 + $0xc] sm:$0xf]
        %v230 = vld [vmem:[%s171 + $0x10] sm:$0xf]
        %v231 = vld [vmem:[%s171 + $0x14] sm:$0xf]
        %v232 = vld [vmem:[%s171 + $0x18] sm:$0xf]
        %v233 = vld [vmem:[%s171 + $0x1c] sm:$0xf]
        %v234 = vld [vmem:[%s171 + $0x20] sm:$0xf]
        %v235 = vld [vmem:[%s171 + $0x24] sm:$0xf]
        %v236 = vld [vmem:[%s171 + $0x28] sm:$0xf]
        %v237 = vld [vmem:[%s171 + $0x2c] sm:$0xf]
        %v238 = vld [vmem:[%s171 + $0x30] sm:$0xf]
        %v239 = vld [vmem:[%s171 + $0x34] sm:$0xf]
        %v240 = vld [vmem:[%s171 + $0x38] sm:$0xf]
        %v241 = vld [vmem:[%s171 + $0x3c] sm:$0xf]
        %v242 = vld [vmem:[#allocation5] sm:$0xf]
        %v243 = vld [vmem:[#allocation5 + $0x4] sm:$0xf]
        %v244 = vld [vmem:[#allocation5 + $0x8] sm:$0xf]
        %v245 = vld [vmem:[#allocation5 + $0xc] sm:$0xf]
        %v246 = vld [vmem:[#allocation5 + $0x10] sm:$0xf]
        %v247 = vld [vmem:[#allocation5 + $0x14] sm:$0xf]
        %v248 = vld [vmem:[#allocation5 + $0x18] sm:$0xf]
        %v249 = vld [vmem:[#allocation5 + $0x1c] sm:$0xf]
        %v250 = vld [vmem:[#allocation5 + $0x20] sm:$0xf]
        %v251 = vld [vmem:[#allocation5 + $0x24] sm:$0xf]
        %v252 = vld [vmem:[#allocation5 + $0x28] sm:$0xf]
        %v253 = vld [vmem:[#allocation5 + $0x2c] sm:$0xf]
        %v254 = vld [vmem:[#allocation5 + $0x30] sm:$0xf]
        %v255 = vld [vmem:[#allocation5 + $0x34] sm:$0xf]
        %v256 = vld [vmem:[#allocation5 + $0x38] sm:$0xf]
        %v257 = vld [vmem:[#allocation5 + $0x3c] sm:$0xf]
        %v258 = vld [vmem:[#allocation5 + $0x40] sm:$0xf]
        %v259 = vld [vmem:[#allocation5 + $0x44] sm:$0xf]
        %v260 = vld [vmem:[#allocation5 + $0x48] sm:$0xf]
        %v261 = vld [vmem:[#allocation5 + $0x4c] sm:$0xf]
        %v262 = vld [vmem:[#allocation5 + $0x50] sm:$0xf]
        %v263 = vld [vmem:[#allocation5 + $0x54] sm:$0xf]
        %v264 = vld [vmem:[#allocation5 + $0x58] sm:$0xf]
        %v265 = vld [vmem:[#allocation5 + $0x5c] sm:$0xf]
        %v266 = vld [vmem:[#allocation5 + $0x60] sm:$0xf]
        %v267 = vld [vmem:[#allocation5 + $0x64] sm:$0xf]
        %v268 = vld [vmem:[#allocation5 + $0x68] sm:$0xf]
        %v269 = vld [vmem:[#allocation5 + $0x6c] sm:$0xf]
        %v270 = vld [vmem:[#allocation5 + $0x70] sm:$0xf]
        %v271 = vld [vmem:[#allocation5 + $0x74] sm:$0xf]
        %v272 = vld [vmem:[#allocation5 + $0x78] sm:$0xf]
        %v273 = vld [vmem:[#allocation5 + $0x7c] sm:$0xf]
        %v290 = vunpack.c.l.b16 %v226
        %v291 = vunpack.c.l.b16 %v227
        %v292 = vunpack.c.l.b16 %v228
        %v293 = vunpack.c.l.b16 %v229
        %v294 = vunpack.c.l.b16 %v230
        %v295 = vunpack.c.l.b16 %v231
        %v296 = vunpack.c.l.b16 %v232
        %v297 = vunpack.c.l.b16 %v233
        %v298 = vunpack.c.l.b16 %v234
        %v299 = vunpack.c.l.b16 %v235
        %v300 = vunpack.c.l.b16 %v236
        %v301 = vunpack.c.l.b16 %v237
        %v302 = vunpack.c.l.b16 %v238
        %v303 = vunpack.c.l.b16 %v239
        %v304 = vunpack.c.l.b16 %v240
        %v305 = vunpack.c.l.b16 %v241
        %v306 = vpack.c.b16 %v291, %v290
        %v307 = vpack.c.b16 %v293, %v292
        %v308 = vpack.c.b16 %v295, %v294
        %v309 = vpack.c.b16 %v297, %v296
        %v310 = vpack.c.b16 %v299, %v298
        %v311 = vpack.c.b16 %v301, %v300
        %v312 = vpack.c.b16 %v303, %v302
        %v313 = vpack.c.b16 %v305, %v304
        %v354 = vunpack.c.l.b16 %v242
        %v355 = vunpack.c.l.b16 %v243
        %v356 = vunpack.c.l.b16 %v244
        %v357 = vunpack.c.l.b16 %v245
        %v358 = vunpack.c.l.b16 %v246
        %v359 = vunpack.c.l.b16 %v247
        %v360 = vunpack.c.l.b16 %v248
        %v361 = vunpack.c.l.b16 %v249
        %v362 = vunpack.c.l.b16 %v250
        %v363 = vunpack.c.l.b16 %v251
        %v364 = vunpack.c.l.b16 %v252
        %v365 = vunpack.c.l.b16 %v253
        %v366 = vunpack.c.l.b16 %v254
        %v367 = vunpack.c.l.b16 %v255
        %v368 = vunpack.c.l.b16 %v256
        %v369 = vunpack.c.l.b16 %v257
        %v370 = vunpack.c.l.b16 %v258
        %v371 = vunpack.c.l.b16 %v259
        %v372 = vunpack.c.l.b16 %v260
        %v373 = vunpack.c.l.b16 %v261
        %v374 = vunpack.c.l.b16 %v262
        %v375 = vunpack.c.l.b16 %v263
        %v376 = vunpack.c.l.b16 %v264
        %v377 = vunpack.c.l.b16 %v265
        %v378 = vunpack.c.l.b16 %v266
        %v379 = vunpack.c.l.b16 %v267
        %v380 = vunpack.c.l.b16 %v268
        %v381 = vunpack.c.l.b16 %v269
        %v382 = vunpack.c.l.b16 %v270
        %v383 = vunpack.c.l.b16 %v271
        %v384 = vunpack.c.l.b16 %v272
        %v385 = vunpack.c.l.b16 %v273
        %v386 = vpack.c.b16 %v355, %v354
        %v387 = vpack.c.b16 %v357, %v356
        %v388 = vpack.c.b16 %v359, %v358
        %v389 = vpack.c.b16 %v361, %v360
        %v390 = vpack.c.b16 %v363, %v362
        %v391 = vpack.c.b16 %v365, %v364
        %v392 = vpack.c.b16 %v367, %v366
        %v393 = vpack.c.b16 %v369, %v368
        %v394 = vpack.c.b16 %v371, %v370
        %v395 = vpack.c.b16 %v373, %v372
        %v396 = vpack.c.b16 %v375, %v374
        %v397 = vpack.c.b16 %v377, %v376
        %v398 = vpack.c.b16 %v379, %v378
        %v399 = vpack.c.b16 %v381, %v380
        %v400 = vpack.c.b16 %v383, %v382
        %v401 = vpack.c.b16 %v385, %v384
        %418 = vmatpush.bf16.xpose.msra.mxu0 %v393
        %419 = vmatpush.bf16.xpose.msra.mxu0 %v392
        %420 = vmatpush.bf16.xpose.msra.mxu0 %v391
        %421 = vmatpush.bf16.xpose.msra.mxu0 %v390
        %422 = vmatpush.bf16.xpose.msra.mxu0 %v389
        %423 = vmatpush.bf16.xpose.msra.mxu0 %v388
        %424 = vmatpush.bf16.xpose.msra.mxu0 %v387
        %425 = vmatpush.bf16.xpose.msra.mxu0 %v386
        %426 = vmatmul.bf16.gmra.mxu0 %v306
        %v427 = vpop.f32.mrf.mxu0
        %v428 = vadd.f32 0.0, %v427
        %v429 = vpop.f32.mrf.mxu0
        %v430 = vadd.f32 0.0, %v429
        %431 = vmatmul.bf16.gmra.mxu0 %v307
        %v432 = vpop.f32.mrf.mxu0
        %v433 = vadd.f32 0.0, %v432
        %v434 = vpop.f32.mrf.mxu0
        %v435 = vadd.f32 0.0, %v434
        %436 = vmatmul.bf16.gmra.mxu0 %v308
        %v437 = vpop.f32.mrf.mxu0
        %v438 = vadd.f32 0.0, %v437
        %v439 = vpop.f32.mrf.mxu0
        %v440 = vadd.f32 0.0, %v439
        %441 = vmatmul.bf16.gmra.mxu0 %v309
        %v442 = vpop.f32.mrf.mxu0
        %v443 = vadd.f32 0.0, %v442
        %v444 = vpop.f32.mrf.mxu0
        %v445 = vadd.f32 0.0, %v444
        %446 = vmatmul.bf16.gmra.mxu0 %v310
        %v447 = vpop.f32.mrf.mxu0
        %v448 = vadd.f32 0.0, %v447
        %v449 = vpop.f32.mrf.mxu0
        %v450 = vadd.f32 0.0, %v449
        %451 = vmatmul.bf16.gmra.mxu0 %v311
        %v452 = vpop.f32.mrf.mxu0
        %v453 = vadd.f32 0.0, %v452
        %v454 = vpop.f32.mrf.mxu0
        %v455 = vadd.f32 0.0, %v454
        %456 = vmatmul.bf16.gmra.mxu0 %v312
        %v457 = vpop.f32.mrf.mxu0
        %v458 = vadd.f32 0.0, %v457
        %v459 = vpop.f32.mrf.mxu0
        %v460 = vadd.f32 0.0, %v459
        %461 = vmatmul.bf16.gmra.mxu0 %v313
        %v462 = vpop.f32.mrf.mxu0
        %v463 = vadd.f32 0.0, %v462
        %v464 = vpop.f32.mrf.mxu0
        %v465 = vadd.f32 0.0, %v464
        %466 = vdwg.mxu0
        %467 = vmatpush.bf16.xpose.msra.mxu0 %v401
        %468 = vmatpush.bf16.xpose.msra.mxu0 %v400
        %469 = vmatpush.bf16.xpose.msra.mxu0 %v399
        %470 = vmatpush.bf16.xpose.msra.mxu0 %v398
        %471 = vmatpush.bf16.xpose.msra.mxu0 %v397
        %472 = vmatpush.bf16.xpose.msra.mxu0 %v396
        %473 = vmatpush.bf16.xpose.msra.mxu0 %v395
        %474 = vmatpush.bf16.xpose.msra.mxu0 %v394
        %475 = vmatmul.bf16.gmra.mxu0 %v306
        %v476 = vpop.f32.mrf.mxu0
        %v477 = vadd.f32 0.0, %v476
        %v478 = vpop.f32.mrf.mxu0
        %v479 = vadd.f32 0.0, %v478
        %480 = vmatmul.bf16.gmra.mxu0 %v307
        %v481 = vpop.f32.mrf.mxu0
        %v482 = vadd.f32 0.0, %v481
        %v483 = vpop.f32.mrf.mxu0
        %v484 = vadd.f32 0.0, %v483
        %485 = vmatmul.bf16.gmra.mxu0 %v308
        %v486 = vpop.f32.mrf.mxu0
        %v487 = vadd.f32 0.0, %v486
        %v488 = vpop.f32.mrf.mxu0
        %v489 = vadd.f32 0.0, %v488
        %490 = vmatmul.bf16.gmra.mxu0 %v309
        %v491 = vpop.f32.mrf.mxu0
        %v492 = vadd.f32 0.0, %v491
        %v493 = vpop.f32.mrf.mxu0
        %v494 = vadd.f32 0.0, %v493
        %495 = vmatmul.bf16.gmra.mxu0 %v310
        %v496 = vpop.f32.mrf.mxu0
        %v497 = vadd.f32 0.0, %v496
        %v498 = vpop.f32.mrf.mxu0
        %v499 = vadd.f32 0.0, %v498
        %500 = vmatmul.bf16.gmra.mxu0 %v311
        %v501 = vpop.f32.mrf.mxu0
        %v502 = vadd.f32 0.0, %v501
        %v503 = vpop.f32.mrf.mxu0
        %v504 = vadd.f32 0.0, %v503
        %505 = vmatmul.bf16.gmra.mxu0 %v312
        %v506 = vpop.f32.mrf.mxu0
        %v507 = vadd.f32 0.0, %v506
        %v508 = vpop.f32.mrf.mxu0
        %v509 = vadd.f32 0.0, %v508
        %510 = vmatmul.bf16.gmra.mxu0 %v313
        %v511 = vpop.f32.mrf.mxu0
        %v512 = vadd.f32 0.0, %v511
        %v513 = vpop.f32.mrf.mxu0
        %v514 = vadd.f32 0.0, %v513
        %515 = vdwg.mxu0
        %v516 = vmul.f32 %v428, 2.0
        %v517 = vmul.f32 %v477, 2.0
        %v518 = vmul.f32 %v430, 2.0
        %v519 = vmul.f32 %v479, 2.0
        %v520 = vmul.f32 %v433, 2.0
        %v521 = vmul.f32 %v482, 2.0
        %v522 = vmul.f32 %v435, 2.0
        %v523 = vmul.f32 %v484, 2.0
        %v524 = vmul.f32 %v438, 2.0
        %v525 = vmul.f32 %v487, 2.0
        %v526 = vmul.f32 %v440, 2.0
        %v527 = vmul.f32 %v489, 2.0
        %v528 = vmul.f32 %v443, 2.0
        %v529 = vmul.f32 %v492, 2.0
        %v530 = vmul.f32 %v445, 2.0
        %v531 = vmul.f32 %v494, 2.0
        %v532 = vmul.f32 %v448, 2.0
        %v533 = vmul.f32 %v497, 2.0
        %v534 = vmul.f32 %v450, 2.0
        %v535 = vmul.f32 %v499, 2.0
        %v536 = vmul.f32 %v453, 2.0
        %v537 = vmul.f32 %v502, 2.0
        %v538 = vmul.f32 %v455, 2.0
        %v539 = vmul.f32 %v504, 2.0
        %v540 = vmul.f32 %v458, 2.0
        %v541 = vmul.f32 %v507, 2.0
        %v542 = vmul.f32 %v460, 2.0
        %v543 = vmul.f32 %v509, 2.0
        %v544 = vmul.f32 %v463, 2.0
        %v545 = vmul.f32 %v512, 2.0
        %v546 = vmul.f32 %v465, 2.0
        %v547 = vmul.f32 %v514, 2.0
        %v548 = vmul.f32 %v516, 1.442695
        %v549 = vpow.pop %v548
        %v550 = vmul.f32 %v517, 1.442695
        %v551 = vpow.pop %v550
        %v552 = vmul.f32 %v518, 1.442695
        %v553 = vpow.pop %v552
        %v554 = vmul.f32 %v519, 1.442695
        %v555 = vpow.pop %v554
        %v556 = vmul.f32 %v520, 1.442695
        %v557 = vpow.pop %v556
        %v558 = vmul.f32 %v521, 1.442695
        %v559 = vpow.pop %v558
        %v560 = vmul.f32 %v522, 1.442695
        %v561 = vpow.pop %v560
        %v562 = vmul.f32 %v523, 1.442695
        %v563 = vpow.pop %v562
        %v564 = vmul.f32 %v524, 1.442695
        %v565 = vpow.pop %v564
        %v566 = vmul.f32 %v525, 1.442695
        %v567 = vpow.pop %v566
        %v568 = vmul.f32 %v526, 1.442695
        %v569 = vpow.pop %v568
        %v570 = vmul.f32 %v527, 1.442695
        %v571 = vpow.pop %v570
        %v572 = vmul.f32 %v528, 1.442695
        %v573 = vpow.pop %v572
        %v574 = vmul.f32 %v529, 1.442695
        %v575 = vpow.pop %v574
        %v576 = vmul.f32 %v530, 1.442695
        %v577 = vpow.pop %v576
        %v578 = vmul.f32 %v531, 1.442695
        %v579 = vpow.pop %v578
        %v580 = vmul.f32 %v532, 1.442695
        %v581 = vpow.pop %v580
        %v582 = vmul.f32 %v533, 1.442695
        %v583 = vpow.pop %v582
        %v584 = vmul.f32 %v534, 1.442695
        %v585 = vpow.pop %v584
        %v586 = vmul.f32 %v535, 1.442695
        %v587 = vpow.pop %v586
        %v588 = vmul.f32 %v536, 1.442695
        %v589 = vpow.pop %v588
        %v590 = vmul.f32 %v537, 1.442695
        %v591 = vpow.pop %v590
        %v592 = vmul.f32 %v538, 1.442695
        %v593 = vpow.pop %v592
        %v594 = vmul.f32 %v539, 1.442695
        %v595 = vpow.pop %v594
        %v596 = vmul.f32 %v540, 1.442695
        %v597 = vpow.pop %v596
        %v598 = vmul.f32 %v541, 1.442695
        %v599 = vpow.pop %v598
        %v600 = vmul.f32 %v542, 1.442695
        %v601 = vpow.pop %v600
        %v602 = vmul.f32 %v543, 1.442695
        %v603 = vpow.pop %v602
        %v604 = vmul.f32 %v544, 1.442695
        %v605 = vpow.pop %v604
        %v606 = vmul.f32 %v545, 1.442695
        %v607 = vpow.pop %v606
        %v608 = vmul.f32 %v546, 1.442695
        %v609 = vpow.pop %v608
        %v610 = vmul.f32 %v547, 1.442695
        %v611 = vpow.pop %v610
        %s612 = smul.u32 %s21, 128
        %v613 = vlaneseq
        %v614 = vshrl.u32 %v613, 7
        %v615 = vadd.s32 %v614, 8
        %v616 = vadd.s32 %v614, 16
        %v617 = vadd.s32 %v614, 24
        %v618 = vadd.s32 %v614, 32
        %v619 = vadd.s32 %v614, 40
        %v620 = vadd.s32 %v614, 48
        %v621 = vadd.s32 %v614, 56
        %v622 = vadd.s32 %v614, 64
        %v623 = vadd.s32 %v614, 72
        %v624 = vadd.s32 %v614, 80
        %v625 = vadd.s32 %v614, 88
        %v626 = vadd.s32 %v614, 96
        %v627 = vadd.s32 %v614, 104
        %v628 = vadd.s32 %v614, 112
        %v629 = vadd.s32 %v614, 120
        %v630 = vstv %s612
        %v631 = vadd.s32 %v630, %v614
        %v632 = vadd.s32 %v630, %v615
        %v633 = vadd.s32 %v630, %v616
        %v634 = vadd.s32 %v630, %v617
        %v635 = vadd.s32 %v630, %v618
        %v636 = vadd.s32 %v630, %v619
        %v637 = vadd.s32 %v630, %v620
        %v638 = vadd.s32 %v630, %v621
        %v639 = vadd.s32 %v630, %v622
        %v640 = vadd.s32 %v630, %v623
        %v641 = vadd.s32 %v630, %v624
        %v642 = vadd.s32 %v630, %v625
        %v643 = vadd.s32 %v630, %v626
        %v644 = vadd.s32 %v630, %v627
        %v645 = vadd.s32 %v630, %v628
        %v646 = vadd.s32 %v630, %v629
        %s647 = smul.u32 %s22, 256
        %v648 = vlaneseq
        %v649 = vand.u32 %v648, 127
        %v650 = vadd.s32 %v649, 128
        %v651 = vstv %s647
        %v652 = vadd.s32 %v651, %v649
        %v653 = vadd.s32 %v651, %v650
        %vm654 = vcmp.ne.s32.totalorder %v631, %v652
        %vm655 = vcmp.ne.s32.totalorder %v631, %v653
        %vm656 = vcmp.ne.s32.totalorder %v632, %v652
        %vm657 = vcmp.ne.s32.totalorder %v632, %v653
        %vm658 = vcmp.ne.s32.totalorder %v633, %v652
        %vm659 = vcmp.ne.s32.totalorder %v633, %v653
        %vm660 = vcmp.ne.s32.totalorder %v634, %v652
        %vm661 = vcmp.ne.s32.totalorder %v634, %v653
        %vm662 = vcmp.ne.s32.totalorder %v635, %v652
        %vm663 = vcmp.ne.s32.totalorder %v635, %v653
        %vm664 = vcmp.ne.s32.totalorder %v636, %v652
        %vm665 = vcmp.ne.s32.totalorder %v636, %v653
        %vm666 = vcmp.ne.s32.totalorder %v637, %v652
        %vm667 = vcmp.ne.s32.totalorder %v637, %v653
        %vm668 = vcmp.ne.s32.totalorder %v638, %v652
        %vm669 = vcmp.ne.s32.totalorder %v638, %v653
        %vm670 = vcmp.ne.s32.totalorder %v639, %v652
        %vm671 = vcmp.ne.s32.totalorder %v639, %v653
        %vm672 = vcmp.ne.s32.totalorder %v640, %v652
        %vm673 = vcmp.ne.s32.totalorder %v640, %v653
        %vm674 = vcmp.ne.s32.totalorder %v641, %v652
        %vm675 = vcmp.ne.s32.totalorder %v641, %v653
        %vm676 = vcmp.ne.s32.totalorder %v642, %v652
        %vm677 = vcmp.ne.s32.totalorder %v642, %v653
        %vm678 = vcmp.ne.s32.totalorder %v643, %v652
        %vm679 = vcmp.ne.s32.totalorder %v643, %v653
        %vm680 = vcmp.ne.s32.totalorder %v644, %v652
        %vm681 = vcmp.ne.s32.totalorder %v644, %v653
        %vm682 = vcmp.ne.s32.totalorder %v645, %v652
        %vm683 = vcmp.ne.s32.totalorder %v645, %v653
        %vm684 = vcmp.ne.s32.totalorder %v646, %v652
        %vm685 = vcmp.ne.s32.totalorder %v646, %v653
        %vm686 = vcmp.lt.s32.totalorder %v652, 16
        %vm687 = vcmp.lt.s32.totalorder %v653, 16
        %vm688 = vmand %vm654, %vm686
        %vm689 = vmand %vm655, %vm687
        %vm690 = vmand %vm656, %vm686
        %vm691 = vmand %vm657, %vm687
        %vm692 = vmand %vm658, %vm686
        %vm693 = vmand %vm659, %vm687
        %vm694 = vmand %vm660, %vm686
        %vm695 = vmand %vm661, %vm687
        %vm696 = vmand %vm662, %vm686
        %vm697 = vmand %vm663, %vm687
        %vm698 = vmand %vm664, %vm686
        %vm699 = vmand %vm665, %vm687
        %vm700 = vmand %vm666, %vm686
        %vm701 = vmand %vm667, %vm687
        %vm702 = vmand %vm668, %vm686
        %vm703 = vmand %vm669, %vm687
        %vm704 = vmand %vm670, %vm686
        %vm705 = vmand %vm671, %vm687
        %vm706 = vmand %vm672, %vm686
        %vm707 = vmand %vm673, %vm687
        %vm708 = vmand %vm674, %vm686
        %vm709 = vmand %vm675, %vm687
        %vm710 = vmand %vm676, %vm686
        %vm711 = vmand %vm677, %vm687
        %vm712 = vmand %vm678, %vm686
        %vm713 = vmand %vm679, %vm687
        %vm714 = vmand %vm680, %vm686
        %vm715 = vmand %vm681, %vm687
        %vm716 = vmand %vm682, %vm686
        %vm717 = vmand %vm683, %vm687
        %vm718 = vmand %vm684, %vm686
        %vm719 = vmand %vm685, %vm687
        %v720 = vsel %vm688, %v549, 0.0
        %v721 = vsel %vm689, %v551, 0.0
        %v722 = vsel %vm690, %v553, 0.0
        %v723 = vsel %vm691, %v555, 0.0
        %v724 = vsel %vm692, %v557, 0.0
        %v725 = vsel %vm693, %v559, 0.0
        %v726 = vsel %vm694, %v561, 0.0
        %v727 = vsel %vm695, %v563, 0.0
        %v728 = vsel %vm696, %v565, 0.0
        %v729 = vsel %vm697, %v567, 0.0
        %v730 = vsel %vm698, %v569, 0.0
        %v731 = vsel %vm699, %v571, 0.0
        %v732 = vsel %vm700, %v573, 0.0
        %v733 = vsel %vm701, %v575, 0.0
        %v734 = vsel %vm702, %v577, 0.0
        %v735 = vsel %vm703, %v579, 0.0
        %v736 = vsel %vm704, %v581, 0.0
        %v737 = vsel %vm705, %v583, 0.0
        %v738 = vsel %vm706, %v585, 0.0
        %v739 = vsel %vm707, %v587, 0.0
        %v740 = vsel %vm708, %v589, 0.0
        %v741 = vsel %vm709, %v591, 0.0
        %v742 = vsel %vm710, %v593, 0.0
        %v743 = vsel %vm711, %v595, 0.0
        %v744 = vsel %vm712, %v597, 0.0
        %v745 = vsel %vm713, %v599, 0.0
        %v746 = vsel %vm714, %v601, 0.0
        %v747 = vsel %vm715, %v603, 0.0
        %v748 = vsel %vm716, %v605, 0.0
        %v749 = vsel %vm717, %v607, 0.0
        %v750 = vsel %vm718, %v609, 0.0
        %v751 = vsel %vm719, %v611, 0.0
        %v752 = vadd.f32 %v720, %v721
        %v753 = vadd.f32 %v722, %v723
        %v754 = vadd.f32 %v724, %v725
        %v755 = vadd.f32 %v726, %v727
        %v756 = vadd.f32 %v728, %v729
        %v757 = vadd.f32 %v730, %v731
        %v758 = vadd.f32 %v732, %v733
        %v759 = vadd.f32 %v734, %v735
        %v760 = vadd.f32 %v736, %v737
        %v761 = vadd.f32 %v738, %v739
        %v762 = vadd.f32 %v740, %v741
        %v763 = vadd.f32 %v742, %v743
        %v764 = vadd.f32 %v744, %v745
        %v765 = vadd.f32 %v746, %v747
        %v766 = vadd.f32 %v748, %v749
        %v767 = vadd.f32 %v750, %v751
        %v768 = vld [vmem:[#allocation2] sm:$0xff]
        %v769 = vld [vmem:[#allocation2 + $0x8] sm:$0xff]
        %v770 = vld [vmem:[#allocation2 + $0x10] sm:$0xff]
        %v771 = vld [vmem:[#allocation2 + $0x18] sm:$0xff]
        %v772 = vld [vmem:[#allocation2 + $0x20] sm:$0xff]
        %v773 = vld [vmem:[#allocation2 + $0x28] sm:$0xff]
        %v774 = vld [vmem:[#allocation2 + $0x30] sm:$0xff]
        %v775 = vld [vmem:[#allocation2 + $0x38] sm:$0xff]
        %v776 = vld [vmem:[#allocation2 + $0x40] sm:$0xff]
        %v777 = vld [vmem:[#allocation2 + $0x48] sm:$0xff]
        %v778 = vld [vmem:[#allocation2 + $0x50] sm:$0xff]
        %v779 = vld [vmem:[#allocation2 + $0x58] sm:$0xff]
        %v780 = vld [vmem:[#allocation2 + $0x60] sm:$0xff]
        %v781 = vld [vmem:[#allocation2 + $0x68] sm:$0xff]
        %v782 = vld [vmem:[#allocation2 + $0x70] sm:$0xff]
        %v783 = vld [vmem:[#allocation2 + $0x78] sm:$0xff]
        %v784 = vadd.f32 %v768, %v752
        %v785 = vadd.f32 %v769, %v753
        %v786 = vadd.f32 %v770, %v754
        %v787 = vadd.f32 %v771, %v755
        %v788 = vadd.f32 %v772, %v756
        %v789 = vadd.f32 %v773, %v757
        %v790 = vadd.f32 %v774, %v758
        %v791 = vadd.f32 %v775, %v759
        %v792 = vadd.f32 %v776, %v760
        %v793 = vadd.f32 %v777, %v761
        %v794 = vadd.f32 %v778, %v762
        %v795 = vadd.f32 %v779, %v763
        %v796 = vadd.f32 %v780, %v764
        %v797 = vadd.f32 %v781, %v765
        %v798 = vadd.f32 %v782, %v766
        %v799 = vadd.f32 %v783, %v767
        %800 = vst [vmem:[#allocation2] sm:$0xff] %v784
        %801 = vst [vmem:[#allocation2 + $0x8] sm:$0xff] %v785
        %802 = vst [vmem:[#allocation2 + $0x10] sm:$0xff] %v786
        %803 = vst [vmem:[#allocation2 + $0x18] sm:$0xff] %v787
        %804 = vst [vmem:[#allocation2 + $0x20] sm:$0xff] %v788
        %805 = vst [vmem:[#allocation2 + $0x28] sm:$0xff] %v789
        %806 = vst [vmem:[#allocation2 + $0x30] sm:$0xff] %v790
        %807 = vst [vmem:[#allocation2 + $0x38] sm:$0xff] %v791
        %808 = vst [vmem:[#allocation2 + $0x40] sm:$0xff] %v792
        %809 = vst [vmem:[#allocation2 + $0x48] sm:$0xff] %v793
        %810 = vst [vmem:[#allocation2 + $0x50] sm:$0xff] %v794
        %811 = vst [vmem:[#allocation2 + $0x58] sm:$0xff] %v795
        %812 = vst [vmem:[#allocation2 + $0x60] sm:$0xff] %v796
        %813 = vst [vmem:[#allocation2 + $0x68] sm:$0xff] %v797
        %814 = vst [vmem:[#allocation2 + $0x70] sm:$0xff] %v798
        %815 = vst [vmem:[#allocation2 + $0x78] sm:$0xff] %v799
        // Predicated region
        $region41: #{tpu_custom_call.1} parent=27 // pred_check
          %p816 = pneg %p206
        $region42: #{tpu_custom_call.1} parent=27 // pred_check_branch
          %818 = sbr.rel (%p816) target = $region44
        $region43: #{tpu_custom_call.1} parent=27 // pred_region
          %v819 = vld [vmem:[#allocation2] sm:$0xff]
          %v820 = vld [vmem:[#allocation2 + $0x8] sm:$0xff]
          %v821 = vld [vmem:[#allocation2 + $0x10] sm:$0xff]
          %v822 = vld [vmem:[#allocation2 + $0x18] sm:$0xff]
          %v823 = vld [vmem:[#allocation2 + $0x20] sm:$0xff]
          %v824 = vld [vmem:[#allocation2 + $0x28] sm:$0xff]
          %v825 = vld [vmem:[#allocation2 + $0x30] sm:$0xff]
          %v826 = vld [vmem:[#allocation2 + $0x38] sm:$0xff]
          %v827 = vld [vmem:[#allocation2 + $0x40] sm:$0xff]
          %v828 = vld [vmem:[#allocation2 + $0x48] sm:$0xff]
          %v829 = vld [vmem:[#allocation2 + $0x50] sm:$0xff]
          %v830 = vld [vmem:[#allocation2 + $0x58] sm:$0xff]
          %v831 = vld [vmem:[#allocation2 + $0x60] sm:$0xff]
          %v832 = vld [vmem:[#allocation2 + $0x68] sm:$0xff]
          %v833 = vld [vmem:[#allocation2 + $0x70] sm:$0xff]
          %v834 = vld [vmem:[#allocation2 + $0x78] sm:$0xff]
          %835 = vadd.xlane.f32.xlu0 %v819
          %v836 = vpop.xlane.xlu0 %835
          %837 = vadd.xlane.f32.xlu0 %v820
          %v838 = vpop.xlane.xlu0 %837
          %839 = vadd.xlane.f32.xlu0 %v821
          %v840 = vpop.xlane.xlu0 %839
          %841 = vadd.xlane.f32.xlu0 %v822
          %v842 = vpop.xlane.xlu0 %841
          %843 = vadd.xlane.f32.xlu0 %v823
          %v844 = vpop.xlane.xlu0 %843
          %845 = vadd.xlane.f32.xlu0 %v824
          %v846 = vpop.xlane.xlu0 %845
          %847 = vadd.xlane.f32.xlu0 %v825
          %v848 = vpop.xlane.xlu0 %847
          %849 = vadd.xlane.f32.xlu0 %v826
          %v850 = vpop.xlane.xlu0 %849
          %851 = vadd.xlane.f32.xlu0 %v827
          %v852 = vpop.xlane.xlu0 %851
          %853 = vadd.xlane.f32.xlu0 %v828
          %v854 = vpop.xlane.xlu0 %853
          %855 = vadd.xlane.f32.xlu0 %v829
          %v856 = vpop.xlane.xlu0 %855
          %857 = vadd.xlane.f32.xlu0 %v830
          %v858 = vpop.xlane.xlu0 %857
          %859 = vadd.xlane.f32.xlu0 %v831
          %v860 = vpop.xlane.xlu0 %859
          %861 = vadd.xlane.f32.xlu0 %v832
          %v862 = vpop.xlane.xlu0 %861
          %863 = vadd.xlane.f32.xlu0 %v833
          %v864 = vpop.xlane.xlu0 %863
          %865 = vadd.xlane.f32.xlu0 %v834
          %v866 = vpop.xlane.xlu0 %865
          %v867 = vlog2.pop %v836
          %v868 = vmul.f32 %v867, 0.6931472
          %v869 = vlog2.pop %v838
          %v870 = vmul.f32 %v869, 0.6931472
          %v871 = vlog2.pop %v840
          %v872 = vmul.f32 %v871, 0.6931472
          %v873 = vlog2.pop %v842
          %v874 = vmul.f32 %v873, 0.6931472
          %v875 = vlog2.pop %v844
          %v876 = vmul.f32 %v875, 0.6931472
          %v877 = vlog2.pop %v846
          %v878 = vmul.f32 %v877, 0.6931472
          %v879 = vlog2.pop %v848
          %v880 = vmul.f32 %v879, 0.6931472
          %v881 = vlog2.pop %v850
          %v882 = vmul.f32 %v881, 0.6931472
          %v883 = vlog2.pop %v852
          %v884 = vmul.f32 %v883, 0.6931472
          %v885 = vlog2.pop %v854
          %v886 = vmul.f32 %v885, 0.6931472
          %v887 = vlog2.pop %v856
          %v888 = vmul.f32 %v887, 0.6931472
          %v889 = vlog2.pop %v858
          %v890 = vmul.f32 %v889, 0.6931472
          %v891 = vlog2.pop %v860
          %v892 = vmul.f32 %v891, 0.6931472
          %v893 = vlog2.pop %v862
          %v894 = vmul.f32 %v893, 0.6931472
          %v895 = vlog2.pop %v864
          %v896 = vmul.f32 %v895, 0.6931472
          %v897 = vlog2.pop %v866
          %v898 = vmul.f32 %v897, 0.6931472
          %vm899 = vcmask 7168
          %900 = vst.msk [vmem:[%s204] sm:$0xff] %vm899, %v868
          %901 = vst.msk [vmem:[%s204 + $0x8] sm:$0xff] %vm899, %v870
          %902 = vst.msk [vmem:[%s204 + $0x10] sm:$0xff] %vm899, %v872
          %903 = vst.msk [vmem:[%s204 + $0x18] sm:$0xff] %vm899, %v874
          %904 = vst.msk [vmem:[%s204 + $0x20] sm:$0xff] %vm899, %v876
          %905 = vst.msk [vmem:[%s204 + $0x28] sm:$0xff] %vm899, %v878
          %906 = vst.msk [vmem:[%s204 + $0x30] sm:$0xff] %vm899, %v880
          %907 = vst.msk [vmem:[%s204 + $0x38] sm:$0xff] %vm899, %v882
          %908 = vst.msk [vmem:[%s204 + $0x40] sm:$0xff] %vm899, %v884
          %909 = vst.msk [vmem:[%s204 + $0x48] sm:$0xff] %vm899, %v886
          %910 = vst.msk [vmem:[%s204 + $0x50] sm:$0xff] %vm899, %v888
          %911 = vst.msk [vmem:[%s204 + $0x58] sm:$0xff] %vm899, %v890
          %912 = vst.msk [vmem:[%s204 + $0x60] sm:$0xff] %vm899, %v892
          %913 = vst.msk [vmem:[%s204 + $0x68] sm:$0xff] %vm899, %v894
          %914 = vst.msk [vmem:[%s204 + $0x70] sm:$0xff] %vm899, %v896
          %915 = vst.msk [vmem:[%s204 + $0x78] sm:$0xff] %vm899, %v898
        $region44: #{tpu_custom_call.1} parent=27 // pred_fallthru
          _
        %s916 = smul.u32 16, %s21
        %p917 = scmp.lt.s32.totalorder %s916, 31
        %s918 = scalar_select %p917, %s916, 31
        %s919 = smul.addr %s918, 8
        %s920 = scalar_lea.vmem %s2, %s919
        // Predicated region
        $region45: #{tpu_custom_call.1} parent=27 // pred_check
          %p921 = pneg %p99
        $region46: #{tpu_custom_call.1} parent=27 // pred_check_branch
          %923 = sbr.rel (%p921) target = $region48
        $region47: #{tpu_custom_call.1} parent=27 // pred_region
          %s924 = smul.u32 16, %s21
        $region48: #{tpu_custom_call.1} parent=27 // pred_fallthru
          _
      $region28: #{tpu_custom_call.1} parent=5 // pred_fallthru
        _
      %p925 = scmp.le.s32.totalorder 2, %s12
      // Predicated region
      $region49: #{tpu_custom_call.1} parent=5 // pred_check
        %p926 = pneg %p925
      $region50: #{tpu_custom_call.1} parent=5 // pred_check_branch
        %928 = sbr.rel (%p926) target = $region52
      $region51: #{tpu_custom_call.1} parent=5 // pred_region
        %s929 = ssub.s32 %s12, 2
        // Predicated region
        $region53: #{tpu_custom_call.1} parent=51 // pred_check
          %p930 = pneg %p105
        $region54: #{tpu_custom_call.1} parent=51 // pred_check_branch
          %932 = sbr.rel (%p930) target = $region56
        $region55: #{tpu_custom_call.1} parent=51 // pred_region
          %s933 = smul.u32 16, %s23
          %p934 = scmp.lt.s32.totalorder %s933, 31
          %s935 = scalar_select %p934, %s933, 31
          %s936 = smul.addr %s935, 8
          %s937 = scalar_lea.vmem %s2, %s936
        $region56: #{tpu_custom_call.1} parent=51 // pred_fallthru
          _
      $region52: #{tpu_custom_call.1} parent=5 // pred_fallthru
        _
    $region6: #{tpu_custom_call.1} parent=1 // loop_footer
      %s16 = sadd.s32 1, %s12
    $region7: #{tpu_custom_call.1} parent=1 // loop_footer_branch
      %11 = sbr.rel target = $region3
    $region8: #{tpu_custom_call.1} parent=1 // loop_exit
      _
    %938 = vsyncpa [#allocation4], 1
    %s939 = scalar_lea.sflag [#allocation4], 1
    %940 = vsyncpa %s939, 1
    %941 = vsyncpa [#allocation6], 1

</llo_original>
